<compile_context>
chip_gen: v5e
topology: v5e:2x2
jax: 0.10.0
libtpu: 0.0.40
codegen_flags: <defaults>
</compile_context>

<pallas_src>
import functools

import jax
import jax.numpy as jnp
from jax.experimental import pallas as pl
from jax.experimental.pallas import tpu as pltpu


def _fcn_kernel(x_ref, w1_ref, b1_ref, w2_ref, b2_ref, o_ref):
    # x_ref: (tm, H); w1_ref: (H, 4H); b1_ref: (1, 4H); w2_ref: (4H, H);
    # b2_ref: (1, H); o_ref: (tm, H)
    x = x_ref[...].astype(jnp.float32)

    h = jnp.dot(x, w1_ref[...].astype(jnp.float32),
                preferred_element_type=jnp.float32)
    h = h + b1_ref[...].astype(jnp.float32)          # (1, 4H) broadcasts over rows
    h = jnp.maximum(h, jnp.float32(0.0))             # ReLU

    # TODO(synk): training-mode Dropout(p=0.1) not implemented; eval-mode
    # forward (identity) is what is computed here.

    y = jnp.dot(h, w2_ref[...].astype(jnp.float32),
                preferred_element_type=jnp.float32)
    y = y + b2_ref[...].astype(jnp.float32)

    o_ref[...] = y.astype(o_ref.dtype)


def _sublane_multiple(dtype) -> int:
    # f32 -> 8, bf16 -> 16, int8/fp8 -> 32 rows per vreg sublane group.
    itemsize = jnp.dtype(dtype).itemsize
    return max(8, 32 // itemsize)


def _round_up(a: int, b: int) -> int:
    return ((a + b - 1) // b) * b


def fcn_forward(x, w1, b1, w2, b2, *,
                row_tile: int = 256,
                vmem_budget_bytes: int = 24 * 1024 * 1024,
                vmem_limit_bytes: int = 48 * 1024 * 1024):
    """FCN forward.

    x : (..., H)
    w1: (4H, H)  torch nn.Linear weight layout (out, in)
    b1: (4H,)
    w2: (H, 4H)
    b2: (H,)
    """
    orig_shape = x.shape
    H = orig_shape[-1]
    mid = w1.shape[0]
    assert w1.shape == (mid, H) and w2.shape == (H, mid)

    x2 = x.reshape(-1, H)
    n_rows = x2.shape[0]

    # --- row-tile selection (dtype-aware sublanes, VMEM-budget capped) -------
    sub = _sublane_multiple(x.dtype)
    tm = min(_round_up(row_tile, sub), _round_up(n_rows, sub))

    # Rough per-step f32 VMEM footprint: double-buffered x and out tiles plus
    # the (tm, 4H) intermediate; weights/biases are resident once.
    weight_bytes = 4 * (2 * H * mid + mid + H)
    per_row_bytes = 4 * (2 * H + 2 * H + 2 * mid)
    budget = max(vmem_budget_bytes - weight_bytes, per_row_bytes * sub)
    max_rows = max(sub, (budget // per_row_bytes) // sub * sub)
    tm = max(sub, min(tm, max_rows))

    grid = (pl.cdiv(n_rows, tm),)   # ragged last block: OOB writes are dropped

    # Pre-transpose weights once (host/XLA) so both matmuls are (rows, K)@(K, N).
    w1_t = jnp.asarray(w1).T            # (H, 4H)
    w2_t = jnp.asarray(w2).T            # (4H, H)
    b1_2 = jnp.asarray(b1).reshape(1, mid)
    b2_2 = jnp.asarray(b2).reshape(1, H)

    out = pl.pallas_call(
        _fcn_kernel,
        out_shape=jax.ShapeDtypeStruct((n_rows, H), x.dtype),
        grid_spec=pltpu.PrefetchScalarGridSpec(
            num_scalar_prefetch=0,
            grid=grid,
            in_specs=[
                pl.BlockSpec((tm, H), lambda i: (i, 0)),      # x rows
                pl.BlockSpec((H, mid), lambda i: (0, 0)),     # W1^T (resident)
                pl.BlockSpec((1, mid), lambda i: (0, 0)),     # b1   (resident)
                pl.BlockSpec((mid, H), lambda i: (0, 0)),     # W2^T (resident)
                pl.BlockSpec((1, H), lambda i: (0, 0)),       # b2   (resident)
            ],
            out_specs=pl.BlockSpec((tm, H), lambda i: (i, 0)),
        ),
        compiler_params=pltpu.CompilerParams(
            dimension_semantics=("parallel",),
            vmem_limit_bytes=vmem_limit_bytes,
        ),
    )(x2, w1_t, b1_2, w2_t, b2_2)

    return out.reshape(orig_shape)


if __name__ == "__main__":
    # Small shapes consistent with FCN(num_hid=32): x is (batch, seq, hidden).
    B, S, H = 2, 8, 32
    MID = 4 * H

    key = jax.random.PRNGKey(0)
    kx, k1, k2, k3, k4 = jax.random.split(key, 5)

    x = jax.random.normal(kx, (B, S, H), dtype=jnp.float32)
    # torch nn.Linear layout: weight (out, in), bias (out,)
    w1 = jax.random.normal(k1, (MID, H), dtype=jnp.float32) / jnp.sqrt(H)
    b1 = jax.random.normal(k2, (MID,), dtype=jnp.float32) * 0.1
    w2 = jax.random.normal(k3, (H, MID), dtype=jnp.float32) / jnp.sqrt(MID)
    b2 = jax.random.normal(k4, (H,), dtype=jnp.float32) * 0.1

    y = fcn_forward(x, w1, b1, w2, b2)
    jax.block_until_ready(y)

    # Pure-JAX reference (eval-mode forward: dropout is identity).
    hp = jnp.maximum(
        jnp.matmul(x, w1.T, precision=jax.lax.Precision.HIGHEST) + b1, 0.0)
    ref = jnp.matmul(hp, w2.T, precision=jax.lax.Precision.HIGHEST) + b2

    assert y.shape == ref.shape
    assert jnp.allclose(y, ref, atol=1e-4, rtol=1e-4), (
        f"mismatch vs reference: max abs err = {jnp.max(jnp.abs(y - ref))}")

    print("KERNEL_OK")
</pallas_src>

<mosaic_0001>
module attributes {stable_mosaic.version = 11 : i64} {
  func.func @_fcn_kernel(%arg0: i32, %arg1: memref<16x32xf32, #tpu.memory_space<vmem>>, %arg2: memref<32x128xf32, #tpu.memory_space<vmem>>, %arg3: memref<1x128xf32, #tpu.memory_space<vmem>>, %arg4: memref<128x32xf32, #tpu.memory_space<vmem>>, %arg5: memref<1x32xf32, #tpu.memory_space<vmem>>, %arg6: memref<16x32xf32, #tpu.memory_space<vmem>>) attributes {dimension_semantics = [#tpu.dimension_semantics<parallel>], iteration_bounds = array<i64: 1>, scalar_prefetch = 0 : i64, scratch_operands = 0 : i64, tpu.core_type = #tpu.core_type<tc>, window_params = [{transform_indices = @transform_0, window_bounds = array<i64: 16, 32>}, {pipeline_mode = #tpu.pipeline_mode<synchronous>, transform_indices = @transform_1, window_bounds = array<i64: 32, 128>}, {pipeline_mode = #tpu.pipeline_mode<synchronous>, transform_indices = @transform_2, window_bounds = array<i64: 1, 128>}, {pipeline_mode = #tpu.pipeline_mode<synchronous>, transform_indices = @transform_3, window_bounds = array<i64: 128, 32>}, {pipeline_mode = #tpu.pipeline_mode<synchronous>, transform_indices = @transform_4, window_bounds = array<i64: 1, 32>}, {transform_indices = @transform_5, window_bounds = array<i64: 16, 32>}]} {
    %c0 = arith.constant 0 : index
    %c0_0 = arith.constant 0 : index
    %0 = vector.load %arg1[%c0, %c0_0] : memref<16x32xf32, #tpu.memory_space<vmem>>, vector<16x32xf32>
    %c0_1 = arith.constant 0 : index
    %c0_2 = arith.constant 0 : index
    %1 = vector.load %arg2[%c0_1, %c0_2] : memref<32x128xf32, #tpu.memory_space<vmem>>, vector<32x128xf32>
    %cst = arith.constant dense<0.000000e+00> : vector<16x128xf32>
    %2 = tpu.matmul %0, %1, %cst {dimension_numbers = #tpu.dot_dimension_numbers<[1], [0], [0], [1], [0, 0, 1, 1], [], []>} : vector<16x32xf32>, vector<32x128xf32>, vector<16x128xf32> -> vector<16x128xf32>
    %c0_3 = arith.constant 0 : index
    %c0_4 = arith.constant 0 : index
    %3 = vector.load %arg3[%c0_3, %c0_4] : memref<1x128xf32, #tpu.memory_space<vmem>>, vector<1x128xf32>
    %4 = vector.broadcast %3 : vector<1x128xf32> to vector<16x128xf32>
    %5 = arith.addf %2, %4 : vector<16x128xf32>
    %cst_5 = arith.constant 0.000000e+00 : f32
    %6 = vector.broadcast %cst_5 : f32 to vector<16x128xf32>
    %7 = arith.maximumf %5, %6 : vector<16x128xf32>
    %c0_6 = arith.constant 0 : index
    %c0_7 = arith.constant 0 : index
    %8 = vector.load %arg4[%c0_6, %c0_7] : memref<128x32xf32, #tpu.memory_space<vmem>>, vector<128x32xf32>
    %cst_8 = arith.constant dense<0.000000e+00> : vector<16x32xf32>
    %9 = tpu.matmul %7, %8, %cst_8 {dimension_numbers = #tpu.dot_dimension_numbers<[1], [0], [0], [1], [0, 0, 1, 1], [], []>} : vector<16x128xf32>, vector<128x32xf32>, vector<16x32xf32> -> vector<16x32xf32>
    %c0_9 = arith.constant 0 : index
    %c0_10 = arith.constant 0 : index
    %10 = vector.load %arg5[%c0_9, %c0_10] : memref<1x32xf32, #tpu.memory_space<vmem>>, vector<1x32xf32>
    %11 = vector.broadcast %10 : vector<1x32xf32> to vector<16x32xf32>
    %12 = arith.addf %9, %11 : vector<16x32xf32>
    %c0_11 = arith.constant 0 : index
    %c0_12 = arith.constant 0 : index
    %13 = vector.load %arg6[%c0_11, %c0_12] : memref<16x32xf32, #tpu.memory_space<vmem>>, vector<16x32xf32>
    tpu.vector_store %arg6[%c0_11, %c0_12], %12 {strides = array<i32>} : memref<16x32xf32, #tpu.memory_space<vmem>>, vector<16x32xf32>,
    return
  }
  func.func @transform_0(%arg0: i32) -> (i32, i32) {
    %c0_i32 = arith.constant 0 : i32
    %c0_i32_0 = arith.constant 0 : i32
    return %arg0, %c0_i32 : i32, i32
  }
  func.func @transform_1(%arg0: i32) -> (i32, i32) {
    %c0_i32 = arith.constant 0 : i32
    %c0_i32_0 = arith.constant 0 : i32
    %c0_i32_1 = arith.constant 0 : i32
    return %c0_i32, %c0_i32_0 : i32, i32
  }
  func.func @transform_2(%arg0: i32) -> (i32, i32) {
    %c0_i32 = arith.constant 0 : i32
    %c0_i32_0 = arith.constant 0 : i32
    %c0_i32_1 = arith.constant 0 : i32
    return %c0_i32, %c0_i32_0 : i32, i32
  }
  func.func @transform_3(%arg0: i32) -> (i32, i32) {
    %c0_i32 = arith.constant 0 : i32
    %c0_i32_0 = arith.constant 0 : i32
    %c0_i32_1 = arith.constant 0 : i32
    return %c0_i32, %c0_i32_0 : i32, i32
  }
  func.func @transform_4(%arg0: i32) -> (i32, i32) {
    %c0_i32 = arith.constant 0 : i32
    %c0_i32_0 = arith.constant 0 : i32
    %c0_i32_1 = arith.constant 0 : i32
    return %c0_i32, %c0_i32_0 : i32, i32
  }
  func.func @transform_5(%arg0: i32) -> (i32, i32) {
    %c0_i32 = arith.constant 0 : i32
    %c0_i32_0 = arith.constant 0 : i32
    return %arg0, %c0_i32 : i32, i32
  }
}

</mosaic_0001>

<llo_original>
// kernel: tpu_custom_call.1
$region0: #{tpu_custom_call.1}
  #allocation0 [shape = 'u32[]', space=smem, size = 0x4, offset = 0x4, fixed_abs, tag = 'smem constant byte address 0x4 - core index']
  #allocation1 [shape = 'u32[72,128]{1,0:T(1,128)}', space=vmem, size = 0x9000, scoped, tag = 'internal scratch']
  %s0 = inlined_call_operand.vmem [shape: f32[16,32], index: 0, kind: input, shape index: {}]
  %s1 = inlined_call_operand.vmem [shape: f32[32,128], index: 1, kind: input, shape index: {}]
  %s2 = inlined_call_operand.vmem [shape: f32[1,128], index: 2, kind: input, shape index: {}]
  %s3 = inlined_call_operand.vmem [shape: f32[128,32], index: 3, kind: input, shape index: {}]
  %s4 = inlined_call_operand.vmem [shape: f32[1,32], index: 4, kind: input, shape index: {}]
  %s5 = inlined_call_operand.hbm [shape: f32[16,32], index: 5, kind: output, shape index: {}]
  %s6 = sld [smem:[#allocation0]]
  $region30: #{tpu_custom_call.1} parent=0
    _
  %s8 = ssub.s32 1, %s6
  %s9 = scalar_select 0, %s8, %s6
  $region1: #{tpu_custom_call.1} parent=0
    #allocation2 [shape = 'u8[8192]{0}', space=vmem, size = 0x2000, scoped, tag = 'output window, operand 0, single buffered']
    #allocation3 [shape = 's32[1]{0}', space=sflag, size = 0x4, scoped, tag = 'scoped memory for tpu_custom_call.1']
    %10 = vsyncpa [#allocation3], 0
    // Predicated region
    $region2: #{tpu_custom_call.1} parent=1 // pred_check
      _
    $region3: #{tpu_custom_call.1} parent=1 // pred_check_branch
      %12 = sbr.rel (0) target = $region5
    $region4: #{tpu_custom_call.1} parent=1 // pred_region
      _
    $region5: #{tpu_custom_call.1} parent=1 // pred_fallthru
      _
    // Predicated region
    $region6: #{tpu_custom_call.1} parent=1 // pred_check
      _
    $region7: #{tpu_custom_call.1} parent=1 // pred_check_branch
      %14 = sbr.rel (0) target = $region9
    $region8: #{tpu_custom_call.1} parent=1 // pred_region
      _
    $region9: #{tpu_custom_call.1} parent=1 // pred_fallthru
      _
    // Predicated region
    $region10: #{tpu_custom_call.1} parent=1 // pred_check
      _
    $region11: #{tpu_custom_call.1} parent=1 // pred_check_branch
      %16 = sbr.rel (0) target = $region13
    $region12: #{tpu_custom_call.1} parent=1 // pred_region
      _
    $region13: #{tpu_custom_call.1} parent=1 // pred_fallthru
      _
    // Predicated region
    $region14: #{tpu_custom_call.1} parent=1 // pred_check
      _
    $region15: #{tpu_custom_call.1} parent=1 // pred_check_branch
      %18 = sbr.rel (0) target = $region17
    $region16: #{tpu_custom_call.1} parent=1 // pred_region
      _
    $region17: #{tpu_custom_call.1} parent=1 // pred_fallthru
      _
    // Predicated region
    $region18: #{tpu_custom_call.1} parent=1 // pred_check
      _
    $region19: #{tpu_custom_call.1} parent=1 // pred_check_branch
      %20 = sbr.rel (0) target = $region21
    $region20: #{tpu_custom_call.1} parent=1 // pred_region
      _
    $region21: #{tpu_custom_call.1} parent=1 // pred_fallthru
      _
    %v21 = vld [vmem:[%s0] sm:$0xff]
    %v22 = vld [vmem:[%s0 + $0x8] sm:$0xff]
    %v23 = vld [vmem:[%s1] sm:$0xff]
    %v24 = vld [vmem:[%s1 + $0x8] sm:$0xff]
    %v25 = vld [vmem:[%s1 + $0x10] sm:$0xff]
    %v26 = vld [vmem:[%s1 + $0x18] sm:$0xff]
    %v27 = vld [vmem:[%s2] sm:$0x1]
    %v29 = vperm.slane %v27, 0
    %vm31 = vcmask 261120
    %v33 = vsel %vm31, %v21, 0
    %v36 = vsel %vm31, %v22, 0
    %38 = vmatpush.msra.mxu0 0.0
    %39 = vmatpush.msra.mxu0 0.0
    %40 = vmatpush.msra.mxu0 0.0
    %41 = vmatpush.msra.mxu0 0.0
    %42 = vmatpush.msra.mxu0 0.0
    %43 = vmatpush.msra.mxu0 0.0
    %44 = vmatpush.msra.mxu0 0.0
    %45 = vmatpush.msra.mxu0 0.0
    %46 = vmatpush.msra.mxu0 0.0
    %47 = vmatpush.msra.mxu0 0.0
    %48 = vmatpush.msra.mxu0 0.0
    %49 = vmatpush.msra.mxu0 0.0
    %50 = vmatpush.msra.mxu0 %v26
    %51 = vmatpush.msra.mxu0 %v25
    %52 = vmatpush.msra.mxu0 %v24
    %53 = vmatpush.msra.mxu0 %v23
    %54 = vmatmul.f32.gmra.mxu0 %v33
    %v55 = vpop.f32.mrf.mxu0
    %v56 = vadd.f32 %v29, %v55
    %57 = vmatmul.f32.gmra.mxu0 %v36
    %v58 = vpop.f32.mrf.mxu0
    %v59 = vadd.f32 %v29, %v58
    %60 = vdwg.mxu0
    %v61 = vmax.f32 %v56, 0.0
    %v62 = vmax.f32 %v59, 0.0
    %v63 = vld [vmem:[%s3] sm:$0xff]
    %v64 = vld [vmem:[%s3 + $0x8] sm:$0xff]
    %v65 = vld [vmem:[%s3 + $0x10] sm:$0xff]
    %v66 = vld [vmem:[%s3 + $0x18] sm:$0xff]
    %v67 = vld [vmem:[%s3 + $0x20] sm:$0xff]
    %v68 = vld [vmem:[%s3 + $0x28] sm:$0xff]
    %v69 = vld [vmem:[%s3 + $0x30] sm:$0xff]
    %v70 = vld [vmem:[%s3 + $0x38] sm:$0xff]
    %v71 = vld [vmem:[%s3 + $0x40] sm:$0xff]
    %v72 = vld [vmem:[%s3 + $0x48] sm:$0xff]
    %v73 = vld [vmem:[%s3 + $0x50] sm:$0xff]
    %v74 = vld [vmem:[%s3 + $0x58] sm:$0xff]
    %v75 = vld [vmem:[%s3 + $0x60] sm:$0xff]
    %v76 = vld [vmem:[%s3 + $0x68] sm:$0xff]
    %v77 = vld [vmem:[%s3 + $0x70] sm:$0xff]
    %v78 = vld [vmem:[%s3 + $0x78] sm:$0xff]
    %v79 = vld [vmem:[%s4] sm:$0x1]
    %v81 = vperm.slane %v79, 0
    %83 = vmatpush.msra.mxu0 %v78
    %84 = vmatpush.msra.mxu0 %v77
    %85 = vmatpush.msra.mxu0 %v76
    %86 = vmatpush.msra.mxu0 %v75
    %87 = vmatpush.msra.mxu0 %v74
    %88 = vmatpush.msra.mxu0 %v73
    %89 = vmatpush.msra.mxu0 %v72
    %90 = vmatpush.msra.mxu0 %v71
    %91 = vmatpush.msra.mxu0 %v70
    %92 = vmatpush.msra.mxu0 %v69
    %93 = vmatpush.msra.mxu0 %v68
    %94 = vmatpush.msra.mxu0 %v67
    %95 = vmatpush.msra.mxu0 %v66
    %96 = vmatpush.msra.mxu0 %v65
    %97 = vmatpush.msra.mxu0 %v64
    %98 = vmatpush.msra.mxu0 %v63
    %99 = vmatmul.f32.gmra.mxu0 %v61
    %v100 = vpop.f32.mrf.mxu0
    %v101 = vadd.f32 %v81, %v100
    %102 = vmatmul.f32.gmra.mxu0 %v62
    %v103 = vpop.f32.mrf.mxu0
    %v104 = vadd.f32 %v81, %v103
    %105 = vdwg.mxu0
    %106 = vst.msk [vmem:[#allocation2] sm:$0xff] %vm31, %v101
    %107 = vst.msk [vmem:[#allocation2 + $0x8] sm:$0xff] %vm31, %v104
    // Predicated region
    $region22: #{tpu_custom_call.1} parent=1 // pred_check
      _
    $region23: #{tpu_custom_call.1} parent=1 // pred_check_branch
      %109 = sbr.rel (0) target = $region25
    $region24: #{tpu_custom_call.1} parent=1 // pred_region
      %111 = vsyncadd [#allocation3], 0
      %s112 = sshll.u32 [#allocation2], 4
      %s113 = int_to_ptr.vmem [resolvable:$true] %s112
      %s114 = sshll.u32 %s5, 4
      %s115 = int_to_ptr.hbm [resolvable:$true] %s114
      %120 = dma.vmem_to_hbm [thread:$0]  %s113, 256, %s115, [#allocation3], 128, 128, 8
    $region25: #{tpu_custom_call.1} parent=1 // pred_fallthru
      _
    // Predicated region
    $region26: #{tpu_custom_call.1} parent=1 // pred_check
      _
    $region27: #{tpu_custom_call.1} parent=1 // pred_check_branch
      %122 = sbr.rel (0) target = $region29
    $region28: #{tpu_custom_call.1} parent=1 // pred_region
      %124 = dma.done [#allocation3], 256
    $region29: #{tpu_custom_call.1} parent=1 // pred_fallthru
      _
    %125 = vsyncpa [#allocation3], 1

</llo_original>
